<compile_context>
chip_gen: v7x
topology: tpu7x:2x2x1
jax: 0.10.0
libtpu: 0.0.40
codegen_flags: <defaults>
</compile_context>

<pallas_src>
import functools

import jax
import jax.numpy as jnp
from jax import lax
from jax.experimental import pallas as pl
from jax.experimental.pallas import tpu as pltpu

KSIZE = 7
PAD = KSIZE // 2


def _competitive_gating_kernel(x_ref, w1s_ref, w1n_ref, w2t_ref, b2_ref, o_ref,
                               xcol_ref, acc_ref, *, n, dim):
    # x_ref   : (1, dim, n)        unpadded input block, per batch (any float dtype)
    # w1s_ref : (h_t, KSIZE*dim)   signal-half conv1 weight tile (bf16), col = k*dim + c
    # w1n_ref : (h_t, KSIZE*dim)   noise-half  conv1 weight tile (bf16)
    # w2t_ref : (h_t, dim)         1x1 conv weight tile, transposed (bf16)
    # b2_ref  : (dim, 1)           1x1 conv bias (f32)
    # o_ref   : (1, dim, n)        output block, per batch (revisited across hidden tiles)
    # xcol_ref: (KSIZE*dim, n)     bf16 im2col scratch, persists across hidden tiles
    # acc_ref : (dim, n)           f32 accumulator for the 1x1 conv across hidden tiles
    j = pl.program_id(1)

    @pl.when(j == 0)
    def _():
        # New batch: zero the 1x1-conv accumulator and (re)build im2col once.
        acc_ref[...] = jnp.zeros_like(acc_ref)
        xt = x_ref[0].astype(jnp.bfloat16)                        # (dim, n)
        # In-kernel sequence zero-pad (replaces the wrapper-side jnp.pad HBM pass).
        zpad = jnp.zeros((dim, PAD), jnp.bfloat16)
        xp = jnp.concatenate([zpad, xt, zpad], axis=1)            # (dim, n + 2*PAD), VMEM only
        # im2col: row (k*dim + c), column t holds x[c, t + k - PAD].
        xcol_ref[...] = jnp.concatenate(
            [xp[:, k:k + n] for k in range(KSIZE)], axis=0)       # (KSIZE*dim, n)

    xcol = xcol_ref[...]                                          # bf16 MXU operand

    # Fused 7-tap conv for this hidden tile: two MXU contractions with depth 7*dim,
    # f32 accumulation.
    signal = jnp.dot(w1s_ref[...], xcol, preferred_element_type=jnp.float32)  # (h_t, n)
    noise = jnp.dot(w1n_ref[...], xcol, preferred_element_type=jnp.float32)   # (h_t, n)

    # Softmax over the sequence (lane) axis; exact per channel, stats in f32.
    m = jnp.max(noise, axis=1, keepdims=True)                     # (h_t, 1)
    e = jnp.exp(noise - m)                                        # (h_t, n), EUP
    s = jnp.sum(e, axis=1, keepdims=True)                         # (h_t, 1)
    inv_s = pl.reciprocal(s, approx=True)                         # EUP, only h_t values

    # gate * signal with the denominator applied as a lane-broadcast multiply.
    gated = ((e * signal) * inv_s).astype(jnp.bfloat16)           # (h_t, n), bf16 MXU operand

    # 1x1 conv contribution of this hidden tile: w2t[j].T @ gated, accumulated in f32.
    acc_ref[...] += lax.dot_general(
        w2t_ref[...], gated, (((0,), (0,)), ((), ())),
        preferred_element_type=jnp.float32)                       # (dim, n)

    @pl.when(j == pl.num_programs(1) - 1)
    def _():
        o_ref[0] = (acc_ref[...] + b2_ref[...]).astype(o_ref.dtype)


def _pick_h_tile(hidden, n):
    """Largest hidden tile (divisor of hidden, multiple of 8) keeping the per-tile
    f32/bf16 intermediates (signal/noise/e/gated ~ 12 bytes/elem) under ~16 MiB."""
    budget = 16 * 2**20
    h = hidden
    while (h % 2 == 0) and ((h // 2) % 8 == 0) and (h * n * 12 > budget):
        h //= 2
    return h


def competitive_gating(x, w1, w2, b2, heads=4, h_tile=None):
    """x: (b, dim, n); w1: (2*dim*heads, dim, 7); w2: (dim, dim*heads, 1); b2: (dim,).

    x may be f32 or bf16; passing bf16 halves the input-side DMA bytes (the kernel
    computes in bf16 on the MXU with f32 accumulation either way)."""
    b, dim, n = x.shape
    hidden = dim * heads
    assert w1.shape == (2 * hidden, dim, KSIZE)
    assert w2.shape == (dim, hidden, 1)
    assert b2.shape == (dim,)

    if h_tile is None:
        h_tile = _pick_h_tile(hidden, n)
    assert hidden % h_tile == 0, "h_tile must divide hidden"
    assert h_tile == hidden or h_tile % 8 == 0, "h_tile must be sublane-aligned"
    num_j = hidden // h_tile

    # Weight prep (one-time constants in a real model):
    #   w1 (2h, dim, K) -> (2h, K*dim) with column index k*dim + c (matches the
    #   kernel's im2col row order), split into signal/noise halves; 1x1 weight is
    #   transposed to (hidden, dim) so hidden tiles are sublane-aligned blocks.
    w1_flat = jnp.transpose(w1, (0, 2, 1)).reshape(2 * hidden, KSIZE * dim)
    w1_flat = w1_flat.astype(jnp.bfloat16)
    w1s = w1_flat[:hidden]                                        # (hidden, K*dim)
    w1n = w1_flat[hidden:]                                        # (hidden, K*dim)
    w2t = jnp.transpose(w2[:, :, 0], (1, 0)).astype(jnp.bfloat16)  # (hidden, dim)
    b2_k = b2.astype(jnp.float32).reshape(dim, 1)                 # (dim, 1)

    kernel = functools.partial(_competitive_gating_kernel, n=n, dim=dim)

    # Derived VMEM need: double-buffered pipeline blocks + persistent scratch +
    # in-kernel intermediates (f32 noise/e, bf16 gated, im2col build temporaries).
    ibytes = jnp.dtype(x.dtype).itemsize
    xb = dim * n * ibytes
    ob = dim * n * ibytes
    w1b = h_tile * KSIZE * dim * 2
    w2b = h_tile * dim * 2
    bb = 8 * 128 * 4
    pipeline = 2 * (xb + ob + 2 * w1b + w2b + bb)
    scratch = KSIZE * dim * n * 2 + dim * n * 4                   # xcol bf16 + acc f32
    interm = (h_tile * n * (4 + 4 + 4 + 2)                        # signal, noise, e, gated
              + KSIZE * dim * n * 2                               # im2col build temporaries
              + dim * (n + 2 * PAD) * 2)                          # padded xp
    need = pipeline + scratch + interm

    # Clamp the scoped VMEM limit to the device's capacity when we can query it
    # (~108 MiB usable on v5e/v6e, ~54 MiB on v7x); otherwise assume 64 MiB.
    vmem_cap = 64 * 2**20
    try:
        cap = getattr(pltpu.get_tpu_info(), "vmem_capacity_bytes", None)
        if cap:
            vmem_cap = int(cap)
    except Exception:
        pass
    vmem_limit = int(min(int(0.85 * vmem_cap), max(32 * 2**20, need + 8 * 2**20)))

    return pl.pallas_call(
        kernel,
        out_shape=jax.ShapeDtypeStruct((b, dim, n), x.dtype),
        grid_spec=pltpu.PrefetchScalarGridSpec(
            num_scalar_prefetch=0,
            grid=(b, num_j),
            in_specs=[
                pl.BlockSpec((1, dim, n), lambda i, j: (i, 0, 0)),
                pl.BlockSpec((h_tile, KSIZE * dim), lambda i, j: (j, 0)),
                pl.BlockSpec((h_tile, KSIZE * dim), lambda i, j: (j, 0)),
                pl.BlockSpec((h_tile, dim), lambda i, j: (j, 0)),
                pl.BlockSpec((dim, 1), lambda i, j: (0, 0)),
            ],
            out_specs=pl.BlockSpec((1, dim, n), lambda i, j: (i, 0, 0)),
            scratch_shapes=[
                pltpu.VMEM((KSIZE * dim, n), jnp.bfloat16),       # im2col, per batch
                pltpu.VMEM((dim, n), jnp.float32),                # 1x1-conv accumulator
            ],
        ),
        compiler_params=pltpu.CompilerParams(
            dimension_semantics=("parallel", "arbitrary"),
            vmem_limit_bytes=vmem_limit),
    )(x, w1s, w1n, w2t, b2_k)


def _reference(x, w1, w2, b2):
    """Pure-JAX f32 reference mirroring the PyTorch forward."""
    sn = lax.conv_general_dilated(x, w1, (1,), [(PAD, PAD)],
                                  dimension_numbers=('NCH', 'OIH', 'NCH'))
    hidden = w1.shape[0] // 2
    signal, noise = sn[:, :hidden], sn[:, hidden:]
    gate = jax.nn.softmax(noise, axis=-1)
    out = gate * signal
    out = lax.conv_general_dilated(out, w2, (1,), [(0, 0)],
                                   dimension_numbers=('NCH', 'OIH', 'NCH'))
    return out + b2[None, :, None]


if __name__ == "__main__":
    b, dim, n, heads = 2, 8, 32, 4
    hidden = dim * heads

    key = jax.random.PRNGKey(0)
    k1, k2, k3, k4 = jax.random.split(key, 4)
    x = jax.random.normal(k1, (b, dim, n), jnp.float32)
    w1 = jax.random.normal(k2, (2 * hidden, dim, KSIZE), jnp.float32) * 0.1
    w2 = jax.random.normal(k3, (dim, hidden, 1), jnp.float32) * 0.1
    b2 = jax.random.normal(k4, (dim,), jnp.float32) * 0.1

    # h_tile=16 -> two hidden tiles, exercising the accumulated 1x1-conv grid axis
    # (scratch persistence, pl.when init / finalize) in addition to the batch axis.
    out = competitive_gating(x, w1, w2, b2, heads=heads, h_tile=16)
    out = jax.block_until_ready(out)

    ref = _reference(x, w1, w2, b2)
    assert out.shape == (b, dim, n)
    # bf16 MXU operands + approximate reciprocal -> compare against the f32
    # reference with a bf16-appropriate tolerance.
    assert jnp.allclose(out, ref, atol=2e-2, rtol=2e-2), "mismatch vs reference"
    print("KERNEL_OK")
</pallas_src>

<mosaic_0001>
module attributes {stable_mosaic.version = 11 : i64} {
  func.func @_competitive_gating_kernel(%arg0: i32, %arg1: i32, %arg2: memref<1x8x32xf32, #tpu.memory_space<vmem>>, %arg3: memref<16x56xbf16, #tpu.memory_space<vmem>>, %arg4: memref<16x56xbf16, #tpu.memory_space<vmem>>, %arg5: memref<16x8xbf16, #tpu.memory_space<vmem>>, %arg6: memref<8x1xf32, #tpu.memory_space<vmem>>, %arg7: memref<1x8x32xf32, #tpu.memory_space<vmem>>, %arg8: memref<56x32xbf16, #tpu.memory_space<vmem>>, %arg9: memref<8x32xf32, #tpu.memory_space<vmem>>) attributes {dimension_semantics = [#tpu.dimension_semantics<parallel>, #tpu.dimension_semantics<arbitrary>], iteration_bounds = array<i64: 2, 2>, scalar_prefetch = 0 : i64, scratch_operands = 2 : i64, tpu.core_type = #tpu.core_type<tc>, window_params = [{transform_indices = @transform_0, window_bounds = array<i64: 1, 8, 32>}, {transform_indices = @transform_1, window_bounds = array<i64: 16, 56>}, {transform_indices = @transform_2, window_bounds = array<i64: 16, 56>}, {transform_indices = @transform_3, window_bounds = array<i64: 16, 8>}, {pipeline_mode = #tpu.pipeline_mode<synchronous>, transform_indices = @transform_4, window_bounds = array<i64: 8, 1>}, {transform_indices = @transform_5, window_bounds = array<i64: 1, 8, 32>}]} {
    %c0_i32 = arith.constant 0 : i32
    %0 = arith.cmpi eq, %arg1, %c0_i32 : i32
    %1 = arith.extui %0 : i1 to i32
    %c0_i32_0 = arith.constant 0 : i32
    %2 = arith.cmpi ne, %1, %c0_i32_0 : i32
    scf.if %2 {
      %cst_17 = arith.constant 0.000000e+00 : f32
      %28 = vector.broadcast %cst_17 : f32 to vector<8x32xf32>
      %c0_18 = arith.constant 0 : index
      %c0_19 = arith.constant 0 : index
      %29 = vector.load %arg9[%c0_18, %c0_19] : memref<8x32xf32, #tpu.memory_space<vmem>>, vector<8x32xf32>
      tpu.vector_store %arg9[%c0_18, %c0_19], %28 {strides = array<i32>} : memref<8x32xf32, #tpu.memory_space<vmem>>, vector<8x32xf32>,
      %c0_20 = arith.constant 0 : index
      %c0_21 = arith.constant 0 : index
      %c0_22 = arith.constant 0 : index
      %30 = vector.load %arg2[%c0_20, %c0_21, %c0_22] : memref<1x8x32xf32, #tpu.memory_space<vmem>>, vector<1x8x32xf32>
      %31 = vector.shape_cast %30 : vector<1x8x32xf32> to vector<8x32xf32>
      %32 = arith.truncf %31 : vector<8x32xf32> to vector<8x32xbf16>
      %cst_23 = arith.constant 0.000000e+00 : bf16
      %33 = vector.broadcast %cst_23 : bf16 to vector<8x3xbf16>
      %34 = tpu.concatenate %33, %32, %33 in 1 : vector<8x3xbf16>, vector<8x32xbf16>, vector<8x3xbf16> -> vector<8x38xbf16>
      %35 = vector.extract_strided_slice %34 {offsets = [0, 0], sizes = [8, 32], strides = [1, 1]} : vector<8x38xbf16> to vector<8x32xbf16>
      %36 = vector.extract_strided_slice %34 {offsets = [0, 1], sizes = [8, 32], strides = [1, 1]} : vector<8x38xbf16> to vector<8x32xbf16>
      %37 = vector.extract_strided_slice %34 {offsets = [0, 2], sizes = [8, 32], strides = [1, 1]} : vector<8x38xbf16> to vector<8x32xbf16>
      %38 = vector.extract_strided_slice %34 {offsets = [0, 3], sizes = [8, 32], strides = [1, 1]} : vector<8x38xbf16> to vector<8x32xbf16>
      %39 = vector.extract_strided_slice %34 {offsets = [0, 4], sizes = [8, 32], strides = [1, 1]} : vector<8x38xbf16> to vector<8x32xbf16>
      %40 = vector.extract_strided_slice %34 {offsets = [0, 5], sizes = [8, 32], strides = [1, 1]} : vector<8x38xbf16> to vector<8x32xbf16>
      %41 = vector.extract_strided_slice %34 {offsets = [0, 6], sizes = [8, 32], strides = [1, 1]} : vector<8x38xbf16> to vector<8x32xbf16>
      %42 = tpu.concatenate %35, %36, %37, %38, %39, %40, %41 in 0 : vector<8x32xbf16>, vector<8x32xbf16>, vector<8x32xbf16>, vector<8x32xbf16>, vector<8x32xbf16>, vector<8x32xbf16>, vector<8x32xbf16> -> vector<56x32xbf16>
      %c0_24 = arith.constant 0 : index
      %c0_25 = arith.constant 0 : index
      %43 = vector.load %arg8[%c0_24, %c0_25] : memref<56x32xbf16, #tpu.memory_space<vmem>>, vector<56x32xbf16>
      tpu.vector_store %arg8[%c0_24, %c0_25], %42 {strides = array<i32>} : memref<56x32xbf16, #tpu.memory_space<vmem>>, vector<56x32xbf16>,
    } else {
    }
    %c0 = arith.constant 0 : index
    %c0_1 = arith.constant 0 : index
    %3 = vector.load %arg8[%c0, %c0_1] : memref<56x32xbf16, #tpu.memory_space<vmem>>, vector<56x32xbf16>
    %c0_2 = arith.constant 0 : index
    %c0_3 = arith.constant 0 : index
    %4 = vector.load %arg3[%c0_2, %c0_3] : memref<16x56xbf16, #tpu.memory_space<vmem>>, vector<16x56xbf16>
    %cst = arith.constant dense<0.000000e+00> : vector<16x32xf32>
    %5 = tpu.matmul %4, %3, %cst {dimension_numbers = #tpu.dot_dimension_numbers<[1], [0], [0], [1], [0, 0, 1, 1], [], []>} : vector<16x56xbf16>, vector<56x32xbf16>, vector<16x32xf32> -> vector<16x32xf32>
    %c0_4 = arith.constant 0 : index
    %c0_5 = arith.constant 0 : index
    %6 = vector.load %arg4[%c0_4, %c0_5] : memref<16x56xbf16, #tpu.memory_space<vmem>>, vector<16x56xbf16>
    %cst_6 = arith.constant dense<0.000000e+00> : vector<16x32xf32>
    %7 = tpu.matmul %6, %3, %cst_6 {dimension_numbers = #tpu.dot_dimension_numbers<[1], [0], [0], [1], [0, 0, 1, 1], [], []>} : vector<16x56xbf16>, vector<56x32xbf16>, vector<16x32xf32> -> vector<16x32xf32>
    %cst_7 = arith.constant dense<0xFF800000> : vector<16xf32>
    %8 = vector.multi_reduction <maximumf>, %7, %cst_7 [1] : vector<16x32xf32> to vector<16xf32>
    %9 = vector.shape_cast %8 : vector<16xf32> to vector<16x1xf32>
    %10 = vector.broadcast %9 : vector<16x1xf32> to vector<16x32xf32>
    %11 = arith.subf %7, %10 : vector<16x32xf32>
    %12 = math.exp %11 : vector<16x32xf32>
    %cst_8 = arith.constant dense<0.000000e+00> : vector<16xf32>
    %13 = vector.multi_reduction <add>, %12, %cst_8 [1] : vector<16x32xf32> to vector<16xf32>
    %14 = vector.shape_cast %13 : vector<16xf32> to vector<16x1xf32>
    %15 = tpu.reciprocal %14 {approx = true} : vector<16x1xf32> -> vector<16x1xf32>
    %16 = arith.mulf %12, %5 : vector<16x32xf32>
    %17 = vector.broadcast %15 : vector<16x1xf32> to vector<16x32xf32>
    %18 = arith.mulf %16, %17 : vector<16x32xf32>
    %19 = arith.truncf %18 : vector<16x32xf32> to vector<16x32xbf16>
    %c0_9 = arith.constant 0 : index
    %c0_10 = arith.constant 0 : index
    %20 = vector.load %arg9[%c0_9, %c0_10] : memref<8x32xf32, #tpu.memory_space<vmem>>, vector<8x32xf32>
    %c0_11 = arith.constant 0 : index
    %c0_12 = arith.constant 0 : index
    %21 = vector.load %arg5[%c0_11, %c0_12] : memref<16x8xbf16, #tpu.memory_space<vmem>>, vector<16x8xbf16>
    %cst_13 = arith.constant dense<0.000000e+00> : vector<8x32xf32>
    %22 = tpu.matmul %21, %19, %cst_13 {dimension_numbers = #tpu.dot_dimension_numbers<[0], [0], [1], [1], [0, 1, 1, 1], [], []>} : vector<16x8xbf16>, vector<16x32xbf16>, vector<8x32xf32> -> vector<8x32xf32>
    %23 = arith.addf %20, %22 : vector<8x32xf32>
    %c0_14 = arith.constant 0 : index
    %c0_15 = arith.constant 0 : index
    %24 = vector.load %arg9[%c0_14, %c0_15] : memref<8x32xf32, #tpu.memory_space<vmem>>, vector<8x32xf32>
    tpu.vector_store %arg9[%c0_14, %c0_15], %23 {strides = array<i32>} : memref<8x32xf32, #tpu.memory_space<vmem>>, vector<8x32xf32>,
    %c1_i32 = arith.constant 1 : i32
    %25 = arith.cmpi eq, %arg1, %c1_i32 : i32
    %26 = arith.extui %25 : i1 to i32
    %c0_i32_16 = arith.constant 0 : i32
    %27 = arith.cmpi ne, %26, %c0_i32_16 : i32
    scf.if %27 {
      %c0_17 = arith.constant 0 : index
      %c0_18 = arith.constant 0 : index
      %28 = vector.load %arg9[%c0_17, %c0_18] : memref<8x32xf32, #tpu.memory_space<vmem>>, vector<8x32xf32>
      %c0_19 = arith.constant 0 : index
      %c0_20 = arith.constant 0 : index
      %29 = vector.load %arg6[%c0_19, %c0_20] : memref<8x1xf32, #tpu.memory_space<vmem>>, vector<8x1xf32>
      %30 = vector.broadcast %29 : vector<8x1xf32> to vector<8x32xf32>
      %31 = arith.addf %28, %30 : vector<8x32xf32>
      %c0_21 = arith.constant 0 : index
      %c0_22 = arith.constant 0 : index
      %c0_23 = arith.constant 0 : index
      %32 = vector.load %arg7[%c0_21, %c0_22, %c0_23] : memref<1x8x32xf32, #tpu.memory_space<vmem>>, vector<1x8x32xf32>
      %33 = vector.shape_cast %32 : vector<1x8x32xf32> to vector<8x32xf32>
      %34 = vector.shape_cast %31 : vector<8x32xf32> to vector<1x8x32xf32>
      tpu.vector_store %arg7[%c0_21, %c0_22, %c0_23], %34 {strides = array<i32>} : memref<1x8x32xf32, #tpu.memory_space<vmem>>, vector<1x8x32xf32>,
    } else {
    }
    return
  }
  func.func @transform_0(%arg0: i32, %arg1: i32) -> (i32, i32, i32) {
    %c0_i32 = arith.constant 0 : i32
    %c0_i32_0 = arith.constant 0 : i32
    %c0_i32_1 = arith.constant 0 : i32
    return %arg0, %c0_i32, %c0_i32_0 : i32, i32, i32
  }
  func.func @transform_1(%arg0: i32, %arg1: i32) -> (i32, i32) {
    %c0_i32 = arith.constant 0 : i32
    %c0_i32_0 = arith.constant 0 : i32
    return %arg1, %c0_i32 : i32, i32
  }
  func.func @transform_2(%arg0: i32, %arg1: i32) -> (i32, i32) {
    %c0_i32 = arith.constant 0 : i32
    %c0_i32_0 = arith.constant 0 : i32
    return %arg1, %c0_i32 : i32, i32
  }
  func.func @transform_3(%arg0: i32, %arg1: i32) -> (i32, i32) {
    %c0_i32 = arith.constant 0 : i32
    %c0_i32_0 = arith.constant 0 : i32
    return %arg1, %c0_i32 : i32, i32
  }
  func.func @transform_4(%arg0: i32, %arg1: i32) -> (i32, i32) {
    %c0_i32 = arith.constant 0 : i32
    %c0_i32_0 = arith.constant 0 : i32
    %c0_i32_1 = arith.constant 0 : i32
    return %c0_i32, %c0_i32_0 : i32, i32
  }
  func.func @transform_5(%arg0: i32, %arg1: i32) -> (i32, i32, i32) {
    %c0_i32 = arith.constant 0 : i32
    %c0_i32_0 = arith.constant 0 : i32
    %c0_i32_1 = arith.constant 0 : i32
    return %arg0, %c0_i32, %c0_i32_0 : i32, i32, i32
  }
}

</mosaic_0001>

<llo_original>
// kernel: tpu_custom_call.1
$region0: #{tpu_custom_call.1}
  #allocation0 [shape = 'u32[]', space=smem, size = 0x4, offset = 0x4, fixed_abs, tag = 'smem constant byte address 0x4 - core index']
  #allocation1 [shape = 'u32[144,128]{1,0:T(1,128)}', space=vmem, size = 0x12000, scoped, tag = 'internal scratch']
  #allocation2 [shape = 'bf16[56,32]{1,0:T(8,128)(2,1)}', space=vmem, size = 0x3800, scoped, tag = 'scratch operand']
  #allocation3 [shape = 'f32[8,32]{1,0:T(8,128)}', space=vmem, size = 0x1000, scoped, tag = 'scratch operand']
  %s0 = inlined_call_operand.vmem [shape: f32[2,8,32], index: 0, kind: input, shape index: {}]
  %s1 = inlined_call_operand.vmem [shape: bf16[32,56], index: 1, kind: input, shape index: {}]
  %s2 = inlined_call_operand.hbm [shape: bf16[32,56], index: 2, kind: input, shape index: {}]
  %s3 = inlined_call_operand.vmem [shape: bf16[32,8], index: 3, kind: input, shape index: {}]
  %s4 = inlined_call_operand.vmem [shape: f32[8,1], index: 4, kind: input, shape index: {}]
  %s5 = inlined_call_operand.hbm [shape: f32[2,8,32], index: 5, kind: output, shape index: {}]
  %s6 = sld [smem:[#allocation0]]
  $region65: #{tpu_custom_call.1} parent=0
    _
  %s8 = ssub.s32 1, %s6
  %s9 = scalar_select 0, %s8, %s6
  $region1: #{tpu_custom_call.1} parent=0
    #allocation4 [shape = 'u8[8192]{0}', space=vmem, size = 0x2000, scoped, tag = 'input window, operand 2']
    #allocation5 [shape = 's32[2]{0}', space=sflag, size = 0x8, scoped, tag = 'scoped memory for tpu_custom_call.1']
    #allocation6 [shape = 's32[2]{0}', space=sflag, size = 0x8, scoped, tag = 'scoped memory for tpu_custom_call.1']
    #allocation7 [shape = 'u8[8192]{0}', space=vmem, size = 0x2000, scoped, tag = 'output window, operand 0']
    %10 = vsyncpa [#allocation5], 0
    %s11 = scalar_lea.sflag [#allocation5], 1
    %12 = vsyncpa %s11, 0
    %13 = vsyncpa [#allocation6], 0
    %s14 = scalar_lea.sflag [#allocation6], 1
    %15 = vsyncpa %s14, 0
    loop: start=0, step=1, limit=6
    $region2: #{tpu_custom_call.1} parent=1 // loop_pre_header
      _
    $region3: #{tpu_custom_call.1} parent=1 // loop_header
      %s17 = sphi 0, %s21
      %p18 = scmp.ge.s32.totalorder %s17, 6
      %s24 = sphi 0, %s36
      %s25 = sphi 0, %s32
      %s26 = sphi 0, %s24
      %s27 = sphi 0, %s25
      %s28 = sphi 0, %s26
      %s29 = sphi 0, %s27
      %s39 = sphi 0, %s41
      %s42 = sphi 0, %s39
      %s43 = sphi 0, %s42
      %s59 = sphi 0, %s43
      %s65 = sphi 0, %s67
      %s68 = sphi 0, %s65
      %s69 = sphi 0, %s68
      %s85 = sphi 0, %s69
      %s91 = sphi 0, %s93
      %s94 = sphi 0, %s91
      %s95 = sphi 0, %s94
      %s111 = sphi 0, %s95
      %s117 = sphi 0, %s119
      %s120 = sphi 0, %s117
      %s121 = sphi 0, %s120
      %s137 = sphi 0, %s121
      %s141 = sphi 0, %s141
      %s143 = sphi 0, %s141
      %s144 = sphi 0, %s143
      %s158 = sphi 0, %s144
      %s164 = sphi 0, %s166
      %s167 = sphi 0, %s164
      %s168 = sphi 0, %s167
      %s184 = sphi 0, %s168
    $region4: #{tpu_custom_call.1} parent=1 // loop_header_branch
      %20 = sbr.rel (%p18) target = $region8
    $region5: #{tpu_custom_call.1} parent=1 // loop_body
      %s22 = ssub.s32 %s17, 1
      %s23 = ssub.s32 %s17, 2
      %s30 = sadd.s32 1, %s25
      %p31 = scmp.ge.s32.totalorder %s30, 2
      %s32 = scalar_select %p31, 0, %s30
      %s33 = sadd.s32 1, %s24
      %s34 = scalar_select %p31, %s33, %s24
      %p35 = scmp.ge.s32.totalorder %s34, 2
      %s36 = scalar_select %p35, 0, %s34
      %s37 = ssub.s32 %s24, %s36
      %p38 = scmp.eq.s32.totalorder %s37, 0
      %s40 = sadd.s32 %s39, 1
      %s41 = scalar_select %p38, %s39, %s40
      %p44 = pneg %p38
      %p45 = scmp.eq.s32.totalorder %s17, 3
      %p46 = por %p44, %p45
      %p47 = scmp.ne.s32.totalorder %s39, %s42
      %p48 = scmp.eq.s32.totalorder %s17, 0
      %p49 = por %p47, %p48
      %p50 = scmp.ne.s32.totalorder %s39, %s42
      %p51 = scmp.eq.s32.totalorder %s22, 3
      %p52 = por %p50, %p51
      %p53 = scmp.ne.s32.totalorder %s42, %s43
      %p54 = scmp.eq.s32.totalorder %s22, 0
      %p55 = por %p53, %p54
      %p56 = scmp.ne.s32.totalorder %s42, %s43
      %p57 = scmp.eq.s32.totalorder %s23, 3
      %p58 = por %p56, %p57
      %p60 = scmp.ne.s32.totalorder %s43, %s59
      %p61 = scmp.eq.s32.totalorder %s23, 0
      %p62 = por %p60, %p61
      %s63 = ssub.s32 %s25, %s32
      %p64 = scmp.eq.s32.totalorder %s63, 0
      %s66 = sadd.s32 %s65, 1
      %s67 = scalar_select %p64, %s65, %s66
      %p70 = pneg %p64
      %p71 = scmp.eq.s32.totalorder %s17, 3
      %p72 = por %p70, %p71
      %p73 = scmp.ne.s32.totalorder %s65, %s68
      %p74 = scmp.eq.s32.totalorder %s17, 0
      %p75 = por %p73, %p74
      %p76 = scmp.ne.s32.totalorder %s65, %s68
      %p77 = scmp.eq.s32.totalorder %s22, 3
      %p78 = por %p76, %p77
      %p79 = scmp.ne.s32.totalorder %s68, %s69
      %p80 = scmp.eq.s32.totalorder %s22, 0
      %p81 = por %p79, %p80
      %p82 = scmp.ne.s32.totalorder %s68, %s69
      %p83 = scmp.eq.s32.totalorder %s23, 3
      %p84 = por %p82, %p83
      %p86 = scmp.ne.s32.totalorder %s69, %s85
      %p87 = scmp.eq.s32.totalorder %s23, 0
      %p88 = por %p86, %p87
      %s89 = ssub.s32 %s25, %s32
      %p90 = scmp.eq.s32.totalorder %s89, 0
      %s92 = sadd.s32 %s91, 1
      %s93 = scalar_select %p90, %s91, %s92
      %p96 = pneg %p90
      %p97 = scmp.eq.s32.totalorder %s17, 3
      %p98 = por %p96, %p97
      %p99 = scmp.ne.s32.totalorder %s91, %s94
      %p100 = scmp.eq.s32.totalorder %s17, 0
      %p101 = por %p99, %p100
      %p102 = scmp.ne.s32.totalorder %s91, %s94
      %p103 = scmp.eq.s32.totalorder %s22, 3
      %p104 = por %p102, %p103
      %p105 = scmp.ne.s32.totalorder %s94, %s95
      %p106 = scmp.eq.s32.totalorder %s22, 0
      %p107 = por %p105, %p106
      %p108 = scmp.ne.s32.totalorder %s94, %s95
      %p109 = scmp.eq.s32.totalorder %s23, 3
      %p110 = por %p108, %p109
      %p112 = scmp.ne.s32.totalorder %s95, %s111
      %p113 = scmp.eq.s32.totalorder %s23, 0
      %p114 = por %p112, %p113
      %s115 = ssub.s32 %s25, %s32
      %p116 = scmp.eq.s32.totalorder %s115, 0
      %s118 = sadd.s32 %s117, 1
      %s119 = scalar_select %p116, %s117, %s118
      %p122 = pneg %p116
      %p123 = scmp.eq.s32.totalorder %s17, 3
      %p124 = por %p122, %p123
      %p125 = scmp.ne.s32.totalorder %s117, %s120
      %p126 = scmp.eq.s32.totalorder %s17, 0
      %p127 = por %p125, %p126
      %p128 = scmp.ne.s32.totalorder %s117, %s120
      %p129 = scmp.eq.s32.totalorder %s22, 3
      %p130 = por %p128, %p129
      %p131 = scmp.ne.s32.totalorder %s120, %s121
      %p132 = scmp.eq.s32.totalorder %s22, 0
      %p133 = por %p131, %p132
      %p134 = scmp.ne.s32.totalorder %s120, %s121
      %p135 = scmp.eq.s32.totalorder %s23, 3
      %p136 = por %p134, %p135
      %p138 = scmp.ne.s32.totalorder %s121, %s137
      %p139 = scmp.eq.s32.totalorder %s23, 0
      %p140 = por %p138, %p139
      %s142 = sadd.s32 %s141, 1
      %p145 = scmp.eq.s32.totalorder %s17, 3
      %p146 = scmp.ne.s32.totalorder %s141, %s143
      %p147 = scmp.eq.s32.totalorder %s17, 0
      %p148 = por %p146, %p147
      %p149 = scmp.ne.s32.totalorder %s141, %s143
      %p150 = scmp.eq.s32.totalorder %s22, 3
      %p151 = por %p149, %p150
      %p152 = scmp.ne.s32.totalorder %s143, %s144
      %p153 = scmp.eq.s32.totalorder %s22, 0
      %p154 = por %p152, %p153
      %p155 = scmp.ne.s32.totalorder %s143, %s144
      %p156 = scmp.eq.s32.totalorder %s23, 3
      %p157 = por %p155, %p156
      %p159 = scmp.ne.s32.totalorder %s144, %s158
      %p160 = scmp.eq.s32.totalorder %s23, 0
      %p161 = por %p159, %p160
      %s162 = ssub.s32 %s24, %s36
      %p163 = scmp.eq.s32.totalorder %s162, 0
      %s165 = sadd.s32 %s164, 1
      %s166 = scalar_select %p163, %s164, %s165
      %p169 = pneg %p163
      %p170 = scmp.eq.s32.totalorder %s17, 3
      %p171 = por %p169, %p170
      %p172 = scmp.ne.s32.totalorder %s164, %s167
      %p173 = scmp.eq.s32.totalorder %s17, 0
      %p174 = por %p172, %p173
      %p175 = scmp.ne.s32.totalorder %s164, %s167
      %p176 = scmp.eq.s32.totalorder %s22, 3
      %p177 = por %p175, %p176
      %p178 = scmp.ne.s32.totalorder %s167, %s168
      %p179 = scmp.eq.s32.totalorder %s22, 0
      %p180 = por %p178, %p179
      %p181 = scmp.ne.s32.totalorder %s167, %s168
      %p182 = scmp.eq.s32.totalorder %s23, 3
      %p183 = por %p181, %p182
      %p185 = scmp.ne.s32.totalorder %s168, %s184
      %p186 = scmp.eq.s32.totalorder %s23, 0
      %p187 = por %p185, %p186
      %p188 = scmp.le.s32.totalorder 1, %s17
      %p189 = scmp.lt.s32.totalorder %s17, 5
      %p190 = pnand %p188, %p189
      %p191 = pneg %p190
      // Predicated region
      $region9: #{tpu_custom_call.1} parent=5 // pred_check
        _
      $region10: #{tpu_custom_call.1} parent=5 // pred_check_branch
        %193 = sbr.rel (%p190) target = $region12
      $region11: #{tpu_custom_call.1} parent=5 // pred_region
        %s194 = ssub.s32 %s17, 1
        // Predicated region
        $region13: #{tpu_custom_call.1} parent=11 // pred_check
          %p195 = pneg %p154
        $region14: #{tpu_custom_call.1} parent=11 // pred_check_branch
          %197 = sbr.rel (%p195) target = $region16
        $region15: #{tpu_custom_call.1} parent=11 // pred_region
          _
        $region16: #{tpu_custom_call.1} parent=11 // pred_fallthru
          _
      $region12: #{tpu_custom_call.1} parent=5 // pred_fallthru
        _
      %p198 = scmp.lt.s32.totalorder %s17, 4
      // Predicated region
      $region17: #{tpu_custom_call.1} parent=5 // pred_check
        %p199 = pneg %p198
      $region18: #{tpu_custom_call.1} parent=5 // pred_check_branch
        %201 = sbr.rel (%p199) target = $region20
      $region19: #{tpu_custom_call.1} parent=5 // pred_region
        // Predicated region
        $region21: #{tpu_custom_call.1} parent=19 // pred_check
          %p202 = pneg %p49
        $region22: #{tpu_custom_call.1} parent=19 // pred_check_branch
          %204 = sbr.rel (%p202) target = $region24
        $region23: #{tpu_custom_call.1} parent=19 // pred_region
          %p205 = scmp.lt.s32.totalorder %s24, 1
          %s206 = scalar_select %p205, %s24, 1
          %s207 = smul.addr %s206, 8
          %s208 = scalar_lea.vmem %s0, %s207
        $region24: #{tpu_custom_call.1} parent=19 // pred_fallthru
          _
        // Predicated region
        $region25: #{tpu_custom_call.1} parent=19 // pred_check
          %p209 = pneg %p75
        $region26: #{tpu_custom_call.1} parent=19 // pred_check_branch
          %211 = sbr.rel (%p209) target = $region28
        $region27: #{tpu_custom_call.1} parent=19 // pred_region
          %s212 = smul.u32 2, %s25
          %p213 = scmp.lt.s32.totalorder %s212, 3
          %s214 = scalar_select %p213, %s212, 3
          %s215 = smul.addr %s214, 4
          %s216 = scalar_lea.vmem %s1, %s215
          %s217 = smul.u32 2, %s25
        $region28: #{tpu_custom_call.1} parent=19 // pred_fallthru
          _
        // Predicated region
        $region29: #{tpu_custom_call.1} parent=19 // pred_check
          %p218 = pneg %p101
        $region30: #{tpu_custom_call.1} parent=19 // pred_check_branch
          %220 = sbr.rel (%p218) target = $region32
        $region31: #{tpu_custom_call.1} parent=19 // pred_region
          %s221 = sand.u32 %s91, 1
          %s222 = scalar_lea.sflag [#allocation5], %s221
          %s223 = sand.u32 %s91, 1
          %s224 = smul.addr %s223, 8
          %s225 = scalar_lea.vmem [#allocation4], %s224
          %s226 = smul.u32 2, %s25
          %s228 = ssub.s32 128, 128
          %229 = vsyncadd %s222, %s228
          %s230 = smul.addr %s226, 64
          %s231 = scalar_lea.hbm %s2, %s230
          %s232 = sshll.u32 %s225, 4
          %s233 = int_to_ptr.vmem [resolvable:$true] %s232
          %238 = dma.hbm_to_vmem [thread:$0]  %s231, 128, %s233, %s222, 64, 64, 4
        $region32: #{tpu_custom_call.1} parent=19 // pred_fallthru
          _
        // Predicated region
        $region33: #{tpu_custom_call.1} parent=19 // pred_check
          %p239 = pneg %p127
        $region34: #{tpu_custom_call.1} parent=19 // pred_check_branch
          %241 = sbr.rel (%p239) target = $region36
        $region35: #{tpu_custom_call.1} parent=19 // pred_region
          %s242 = smul.u32 2, %s25
          %p243 = scmp.lt.s32.totalorder %s242, 3
          %s244 = scalar_select %p243, %s242, 3
          %s245 = smul.addr %s244, 4
          %s246 = scalar_lea.vmem %s3, %s245
          %s247 = smul.u32 2, %s25
        $region36: #{tpu_custom_call.1} parent=19 // pred_fallthru
          _
      $region20: #{tpu_custom_call.1} parent=5 // pred_fallthru
        _
      %p248 = scmp.le.s32.totalorder 1, %s17
      %p249 = scmp.lt.s32.totalorder %s17, 5
      %p250 = pnand %p248, %p249
      %p251 = pneg %p250
      // Predicated region
      $region37: #{tpu_custom_call.1} parent=5 // pred_check
        _
      $region38: #{tpu_custom_call.1} parent=5 // pred_check_branch
        %253 = sbr.rel (%p250) target = $region40
      $region39: #{tpu_custom_call.1} parent=5 // pred_region
        %s254 = ssub.s32 %s17, 1
        %s255 = sand.u32 %s94, 1
        %s256 = scalar_lea.sflag [#allocation5], %s255
        %s257 = sand.u32 %s94, 1
        %s258 = smul.addr %s257, 8
        %s259 = scalar_lea.vmem [#allocation4], %s258
        // Predicated region
        $region41: #{tpu_custom_call.1} parent=39 // pred_check
          %p260 = pneg %p107
        $region42: #{tpu_custom_call.1} parent=39 // pred_check_branch
          %262 = sbr.rel (%p260) target = $region44
        $region43: #{tpu_custom_call.1} parent=39 // pred_region
          %263 = dma.done %s256, 128
        $region44: #{tpu_custom_call.1} parent=39 // pred_fallthru
          _
        %p264 = scmp.lt.s32.totalorder %s26, 1
        %s265 = scalar_select %p264, %s26, 1
        %s266 = smul.addr %s265, 8
        %s267 = scalar_lea.vmem %s0, %s266
        %p268 = pneg %p55
        %p269 = pneg %p52
        %s270 = smul.u32 2, %s27
        %p271 = scmp.lt.s32.totalorder %s270, 3
        %s272 = scalar_select %p271, %s270, 3
        %s273 = smul.addr %s272, 4
        %s274 = scalar_lea.vmem %s1, %s273
        %p275 = pneg %p81
        %p276 = pneg %p78
        %s277 = sand.u32 %s94, 1
        %s278 = scalar_lea.sflag [#allocation5], %s277
        %s279 = sand.u32 %s94, 1
        %s280 = smul.addr %s279, 8
        %s281 = scalar_lea.vmem [#allocation4], %s280
        %p282 = pneg %p107
        %p283 = pneg %p104
        %s284 = smul.u32 2, %s27
        %p285 = scmp.lt.s32.totalorder %s284, 3
        %s286 = scalar_select %p285, %s284, 3
        %s287 = smul.addr %s286, 4
        %s288 = scalar_lea.vmem %s3, %s287
        %p289 = pneg %p133
        %p290 = pneg %p130
        %p291 = pneg %p154
        %p292 = pneg %p151
        %p293 = pneg %p180
        %p294 = pneg %p177
        %s295 = sand.u32 %s167, 1
        %s296 = scalar_lea.sflag [#allocation6], %s295
        %s297 = sand.u32 %s167, 1
        %s298 = smul.addr %s297, 8
        %s299 = scalar_lea.vmem [#allocation7], %s298
        %p300 = scmp.lt.s32.totalorder %s26, 1
        %s301 = scalar_select %p300, %s26, 1
        %s302 = smul.addr %s301, 8
        %s303 = scalar_lea.vmem %s0, %s302
        %s304 = smul.u32 2, %s27
        %p305 = scmp.lt.s32.totalorder %s304, 3
        %s306 = scalar_select %p305, %s304, 3
        %s307 = smul.addr %s306, 4
        %s308 = scalar_lea.vmem %s1, %s307
        %s309 = smul.u32 2, %s27
        %s310 = smul.u32 2, %s27
        %s311 = smul.u32 2, %s27
        %p312 = scmp.lt.s32.totalorder %s311, 3
        %s313 = scalar_select %p312, %s311, 3
        %s314 = smul.addr %s313, 4
        %s315 = scalar_lea.vmem %s3, %s314
        %s316 = smul.u32 2, %s27
        %p318 = scmp.eq.s32.totalorder %s27, 0
        // Predicated region
        $region45: #{tpu_custom_call.1} parent=39 // pred_check
          %p319 = pneg %p318
        $region46: #{tpu_custom_call.1} parent=39 // pred_check_branch
          %321 = sbr.rel (%p319) target = $region48
        $region47: #{tpu_custom_call.1} parent=39 // pred_region
          %vm322 = vcmask 261120
          %323 = vst.msk [vmem:[#allocation3] sm:$0xff] %vm322, 0.0
          %v324 = vld [vmem:[%s303] sm:$0xff]
          %v325 = vpack.c.bf16 %v324, %v324
          %327 = vrot.lane.b32.xlu0 %v325, 3
          %v328 = vpop.permute.xlu0 %327
          %vm329 = vcmask 23552
          %v332 = vsel %vm329, 0, %v328
          %vm333 = vcmask 285696
          %v334 = vsel %vm333, %v332, 0
          %v336 = vrot.slane %v334, 4
          %337 = vrot.lane.b32.xlu0 %v336, 127
          %v338 = vpop.permute.xlu0 %337
          %339 = vrot.lane.b32.xlu0 %v334, 126
          %v340 = vpop.permute.xlu0 %339
          %341 = vrot.lane.b32.xlu0 %v336, 125
          %v342 = vpop.permute.xlu0 %341
          %343 = vrot.lane.b32.xlu0 %v334, 124
          %v344 = vpop.permute.xlu0 %343
          %345 = vrot.lane.b32.xlu0 %v336, 123
          %v346 = vpop.permute.xlu0 %345
          %347 = vrot.lane.b32.xlu0 %v334, 122
          %v348 = vpop.permute.xlu0 %347
          %vm349 = vcmask 1043456
          %v351 = vsel %vm349, %v334, %v338
          %v354 = vsel %vm349, %v340, %v342
          %v357 = vsel %vm349, %v344, %v346
          %v361 = vunpack.c.l.b16 %v351
          %v362 = vunpack.c.h.b16 %v351
          %v363 = vunpack.c.l.b16 %v354
          %v364 = vunpack.c.h.b16 %v354
          %v365 = vunpack.c.l.b16 %v357
          %v366 = vunpack.c.h.b16 %v357
          %v367 = vunpack.c.l.b16 %v348
          %v368 = vpack.c.b16 %v361, %v361
          %v369 = vpack.c.b16 %v362, %v362
          %v370 = vpack.c.b16 %v363, %v363
          %v371 = vpack.c.b16 %v364, %v364
          %v372 = vpack.c.b16 %v365, %v365
          %v373 = vpack.c.b16 %v366, %v366
          %v374 = vpack.c.b16 %v367, %v367
          %vm382 = vcmask 257024
          %383 = vst.msk [vmem:[#allocation2] sm:$0xf] %vm382, %v368
          %384 = vst.msk [vmem:[#allocation2 + $0x4] sm:$0xf] %vm382, %v369
          %385 = vst.msk [vmem:[#allocation2 + $0x8] sm:$0xf] %vm382, %v370
          %386 = vst.msk [vmem:[#allocation2 + $0xc] sm:$0xf] %vm382, %v371
          %387 = vst.msk [vmem:[#allocation2 + $0x10] sm:$0xf] %vm382, %v372
          %388 = vst.msk [vmem:[#allocation2 + $0x14] sm:$0xf] %vm382, %v373
          %389 = vst.msk [vmem:[#allocation2 + $0x18] sm:$0xf] %vm382, %v374
        $region48: #{tpu_custom_call.1} parent=39 // pred_fallthru
          _
        %v390 = vld [vmem:[#allocation2] sm:$0xf]
        %v391 = vld [vmem:[#allocation2 + $0x4] sm:$0xf]
        %v392 = vld [vmem:[#allocation2 + $0x8] sm:$0xf]
        %v393 = vld [vmem:[#allocation2 + $0xc] sm:$0xf]
        %v394 = vld [vmem:[#allocation2 + $0x10] sm:$0xf]
        %v395 = vld [vmem:[#allocation2 + $0x14] sm:$0xf]
        %v396 = vld [vmem:[#allocation2 + $0x18] sm:$0xf]
        %v397 = vld [vmem:[%s308] sm:$0xf]
        %v398 = vld [vmem:[%s308 + $0x4] sm:$0xf]
        %v401 = vunpack.c.l.b16 %v397
        %v402 = vunpack.c.l.b16 %v398
        %v403 = vpack.c.b16 %v402, %v401
        %v411 = vunpack.c.l.b16 %v390
        %v412 = vunpack.c.l.b16 %v391
        %v413 = vunpack.c.l.b16 %v392
        %v414 = vunpack.c.l.b16 %v393
        %v415 = vunpack.c.l.b16 %v394
        %v416 = vunpack.c.l.b16 %v395
        %v417 = vunpack.c.l.b16 %v396
        %v418 = vpack.c.b16 %v412, %v411
        %v419 = vpack.c.b16 %v414, %v413
        %v420 = vpack.c.b16 %v416, %v415
        %v421 = vpack.c.b16 %v417, %v417
        %vm425 = vcmask 457728
        %v427 = vsel %vm425, %v403, 0
        %vm429 = vcmask 1043456
        %v431 = vsel %vm429, %v421, 0
        %433 = vmatprep.subr.bf16.mxu0 0
        %434 = vmatpush1.bf16.msra.mxu0 %v418
        %435 = vmatprep.subr.bf16.mxu0 0
        %436 = vmatpush1.bf16.msra.mxu0 %v419
        %437 = vmatprep.subr.bf16.mxu0 0
        %438 = vmatpush1.bf16.msra.mxu0 %v420
        %439 = vmatprep.subr.bf16.mxu0 0
        %440 = vmatpush1.bf16.msra.mxu0 %v431
        %441 = vmatprep.subr.bf16.mxu0 0
        %442 = vmatpush1.bf16.msra.mxu0 0
        %443 = vmatprep.subr.bf16.mxu0 0
        %444 = vmatpush1.bf16.msra.mxu0 0
        %445 = vmatprep.subr.bf16.mxu0 0
        %446 = vmatpush1.bf16.msra.mxu0 0
        %447 = vmatprep.subr.bf16.mxu0 0
        %448 = vmatpush1.bf16.msra.mxu0 0
        %449 = vmatprep.subr.bf16.mxu0 0
        %450 = vmatpush1.bf16.msra.mxu0 0
        %451 = vmatprep.subr.bf16.mxu0 0
        %452 = vmatpush1.bf16.msra.mxu0 0
        %453 = vmatprep.subr.bf16.mxu0 0
        %454 = vmatpush1.bf16.msra.mxu0 0
        %455 = vmatprep.subr.bf16.mxu0 0
        %456 = vmatpush1.bf16.msra.mxu0 0
        %457 = vmatprep.subr.bf16.mxu0 0
        %458 = vmatpush1.bf16.msra.mxu0 0
        %459 = vmatprep.subr.bf16.mxu0 0
        %460 = vmatpush1.bf16.msra.mxu0 0
        %461 = vmatprep.subr.bf16.mxu0 0
        %462 = vmatpush1.bf16.msra.mxu0 0
        %463 = vmatprep.subr.bf16.mxu0 0
        %464 = vmatpush1.bf16.msra.mxu0 0
        %465 = vmatprep.mubr.bf16.mxu0 0
        %466 = vmatmul.mubr.bf16.gmra.mrb[0].mxu0 %v427
        %v467 = vpop.f32.mrb[0].mxu0
        %v468 = vadd.f32 0.0, %v467
        %v469 = vpop.f32.mrb[0].mxu0
        %v470 = vpop.f32.mrb[0].mxu0
        %v471 = vadd.f32 0.0, %v470
        %v472 = vpop.f32.mrb[0].mxu0
        %473 = vdwg.mxu0
        %v474 = vld [vmem:[%s259] sm:$0xf]
        %v475 = vld [vmem:[%s259 + $0x4] sm:$0xf]
        %v478 = vunpack.c.l.b16 %v474
        %v479 = vunpack.c.l.b16 %v475
        %v480 = vpack.c.b16 %v479, %v478
        %v482 = vsel %vm425, %v480, 0
        %484 = vmatprep.subr.bf16.mxu0 0
        %485 = vmatpush1.bf16.msra.mxu0 %v418
        %486 = vmatprep.subr.bf16.mxu0 0
        %487 = vmatpush1.bf16.msra.mxu0 %v419
        %488 = vmatprep.subr.bf16.mxu0 0
        %489 = vmatpush1.bf16.msra.mxu0 %v420
        %490 = vmatprep.subr.bf16.mxu0 0
        %491 = vmatpush1.bf16.msra.mxu0 %v431
        %492 = vmatprep.subr.bf16.mxu0 0
        %493 = vmatpush1.bf16.msra.mxu0 0
        %494 = vmatprep.subr.bf16.mxu0 0
        %495 = vmatpush1.bf16.msra.mxu0 0
        %496 = vmatprep.subr.bf16.mxu0 0
        %497 = vmatpush1.bf16.msra.mxu0 0
        %498 = vmatprep.subr.bf16.mxu0 0
        %499 = vmatpush1.bf16.msra.mxu0 0
        %500 = vmatprep.subr.bf16.mxu0 0
        %501 = vmatpush1.bf16.msra.mxu0 0
        %502 = vmatprep.subr.bf16.mxu0 0
        %503 = vmatpush1.bf16.msra.mxu0 0
        %504 = vmatprep.subr.bf16.mxu0 0
        %505 = vmatpush1.bf16.msra.mxu0 0
        %506 = vmatprep.subr.bf16.mxu0 0
        %507 = vmatpush1.bf16.msra.mxu0 0
        %508 = vmatprep.subr.bf16.mxu0 0
        %509 = vmatpush1.bf16.msra.mxu0 0
        %510 = vmatprep.subr.bf16.mxu0 0
        %511 = vmatpush1.bf16.msra.mxu0 0
        %512 = vmatprep.subr.bf16.mxu0 0
        %513 = vmatpush1.bf16.msra.mxu0 0
        %514 = vmatprep.subr.bf16.mxu0 0
        %515 = vmatpush1.bf16.msra.mxu0 0
        %516 = vmatprep.mubr.bf16.mxu0 0
        %517 = vmatmul.mubr.bf16.gmra.mrb[0].mxu0 %v482
        %v518 = vpop.f32.mrb[0].mxu0
        %v519 = vadd.f32 0.0, %v518
        %v520 = vpop.f32.mrb[0].mxu0
        %v521 = vpop.f32.mrb[0].mxu0
        %v522 = vadd.f32 0.0, %v521
        %v523 = vpop.f32.mrb[0].mxu0
        %524 = vdwg.mxu0
        %vm525 = vcmask 261120
        %v526 = vsel %vm525, %v519, -inf
        %527 = vmax.xlane.f32.xlu0 %v526
        %v528 = vpop.xlane.xlu0 %527
        %v529 = vsel %vm525, %v522, -inf
        %530 = vmax.xlane.f32.xlu0 %v529
        %v531 = vpop.xlane.xlu0 %530
        %v532 = vsub.f32 %v519, %v528
        %v533 = vsub.f32 %v522, %v531
        %v534 = vmul.f32 %v532, 1.442695
        %v535 = vpow.pop %v534
        %v536 = vmul.f32 %v533, 1.442695
        %v537 = vpow.pop %v536
        %v538 = vsel %vm525, %v535, 0.0
        %539 = vadd.xlane.f32.xlu0 %v538
        %v540 = vpop.xlane.xlu0 %539
        %v541 = vsel %vm525, %v537, 0.0
        %542 = vadd.xlane.f32.xlu0 %v541
        %v543 = vpop.xlane.xlu0 %542
        %v544 = vrcp.pop %v540
        %v545 = vrcp.pop %v543
        %v546 = vmul.f32 %v535, %v468
        %v547 = vmul.f32 %v537, %v471
        %v548 = vmul.f32 %v546, %v544
        %v549 = vmul.f32 %v547, %v545
        %v550 = vpack.c.bf16 %v549, %v548
        %v551 = vld [vmem:[#allocation3] sm:$0xff]
        %v552 = vld [vmem:[%s315] sm:$0xf]
        %v553 = vld [vmem:[%s315 + $0x4] sm:$0xf]
        %v556 = vunpack.c.l.b16 %v552
        %v557 = vunpack.c.l.b16 %v553
        %v558 = vpack.c.b16 %v557, %v556
        %560 = vxpose.xlu0.c.b16.start [1/8] %v558, 128
        %561 = vxpose.xlu0.c.b16.cont [2/8] 0, 128
        %562 = vxpose.xlu0.c.b16.cont [3/8] 0, 128
        %563 = vxpose.xlu0.c.b16.cont [4/8] 0, 128
        %564 = vxpose.xlu0.c.b16.cont [5/8] 0, 128
        %565 = vxpose.xlu0.c.b16.cont [6/8] 0, 128
        %566 = vxpose.xlu0.c.b16.cont [7/8] 0, 128
        %567 = vxpose.xlu0.c.b16.end [8/8] 0, 128
        %v568 = vpop.trf.xlu0
        %v569 = vpop.trf.xlu0
        %v570 = vpop.trf.xlu0
        %v571 = vpop.trf.xlu0
        %v572 = vpop.trf.xlu0
        %v573 = vpop.trf.xlu0
        %v574 = vpop.trf.xlu0
        %v575 = vpop.trf.xlu0
        %vm576 = vcmask 130048
        %v578 = vsel %vm576, %v568, 0
        %580 = vmatprep.subr.bf16.mxu0 0
        %581 = vmatpush1.bf16.msra.mxu0 %v550
        %582 = vmatprep.subr.bf16.mxu0 0
        %583 = vmatpush1.bf16.msra.mxu0 0
        %584 = vmatprep.subr.bf16.mxu0 0
        %585 = vmatpush1.bf16.msra.mxu0 0
        %586 = vmatprep.subr.bf16.mxu0 0
        %587 = vmatpush1.bf16.msra.mxu0 0
        %588 = vmatprep.subr.bf16.mxu0 0
        %589 = vmatpush1.bf16.msra.mxu0 0
        %590 = vmatprep.subr.bf16.mxu0 0
        %591 = vmatpush1.bf16.msra.mxu0 0
        %592 = vmatprep.subr.bf16.mxu0 0
        %593 = vmatpush1.bf16.msra.mxu0 0
        %594 = vmatprep.subr.bf16.mxu0 0
        %595 = vmatpush1.bf16.msra.mxu0 0
        %596 = vmatprep.subr.bf16.mxu0 0
        %597 = vmatpush1.bf16.msra.mxu0 0
        %598 = vmatprep.subr.bf16.mxu0 0
        %599 = vmatpush1.bf16.msra.mxu0 0
        %600 = vmatprep.subr.bf16.mxu0 0
        %601 = vmatpush1.bf16.msra.mxu0 0
        %602 = vmatprep.subr.bf16.mxu0 0
        %603 = vmatpush1.bf16.msra.mxu0 0
        %604 = vmatprep.subr.bf16.mxu0 0
        %605 = vmatpush1.bf16.msra.mxu0 0
        %606 = vmatprep.subr.bf16.mxu0 0
        %607 = vmatpush1.bf16.msra.mxu0 0
        %608 = vmatprep.subr.bf16.mxu0 0
        %609 = vmatpush1.bf16.msra.mxu0 0
        %610 = vmatprep.subr.bf16.mxu0 0
        %611 = vmatpush1.bf16.msra.mxu0 0
        %612 = vmatprep.mubr.bf16.mxu0 0
        %613 = vmatmul.mubr.bf16.gmra.mrb[0].mxu0 %v578
        %v614 = vpop.f32.mrb[0].mxu0
        %v615 = vadd.f32 0.0, %v614
        %v616 = vpop.f32.mrb[0].mxu0
        %v617 = vpop.f32.mrb[0].mxu0
        %v618 = vpop.f32.mrb[0].mxu0
        %619 = vdwg.mxu0
        %v620 = vadd.f32 %v551, %v615
        %621 = vst.msk [vmem:[#allocation3] sm:$0xff] %vm525, %v620
        %p622 = scmp.eq.s32.totalorder %s27, 1
        // Predicated region
        $region49: #{tpu_custom_call.1} parent=39 // pred_check
          %p623 = pneg %p622
        $region50: #{tpu_custom_call.1} parent=39 // pred_check_branch
          %625 = sbr.rel (%p623) target = $region52
        $region51: #{tpu_custom_call.1} parent=39 // pred_region
          %v626 = vld [vmem:[#allocation3] sm:$0xff]
          %v627 = vld [vmem:[%s4] sm:$0xff]
          %629 = vset.pattern.permute.xlu0 0
          %630 = vperm.xlu0 %629, %v627
          %v631 = vpop.permute.xlu0 %630
          %v633 = vadd.f32 %v626, %v631
          %634 = vst.msk [vmem:[%s299] sm:$0xff] %vm525, %v633
        $region52: #{tpu_custom_call.1} parent=39 // pred_fallthru
          _
        %s635 = sand.u32 %s167, 1
        %s636 = scalar_lea.sflag [#allocation6], %s635
        %s637 = sand.u32 %s167, 1
        %s638 = smul.addr %s637, 8
        %s639 = scalar_lea.vmem [#allocation7], %s638
        // Predicated region
        $region53: #{tpu_custom_call.1} parent=39 // pred_check
          %p640 = pneg %p177
        $region54: #{tpu_custom_call.1} parent=39 // pred_check_branch
          %642 = sbr.rel (%p640) target = $region56
        $region55: #{tpu_custom_call.1} parent=39 // pred_region
          %s644 = ssub.s32 128, 128
          %645 = vsyncadd %s636, %s644
          %s646 = smul.addr %s26, 128
          %s647 = scalar_lea.hbm %s5, %s646
          %s649 = sshll.u32 %s639, 4
          %s650 = int_to_ptr.vmem [resolvable:$true] %s649
          %652 = dma.vmem_to_hbm [thread:$0]  %s650, 128, %s647, %s636
        $region56: #{tpu_custom_call.1} parent=39 // pred_fallthru
          _
      $region40: #{tpu_custom_call.1} parent=5 // pred_fallthru
        _
      %p653 = scmp.le.s32.totalorder 2, %s17
      // Predicated region
      $region57: #{tpu_custom_call.1} parent=5 // pred_check
        %p654 = pneg %p653
      $region58: #{tpu_custom_call.1} parent=5 // pred_check_branch
        %656 = sbr.rel (%p654) target = $region60
      $region59: #{tpu_custom_call.1} parent=5 // pred_region
        %s657 = ssub.s32 %s17, 2
        // Predicated region
        $region61: #{tpu_custom_call.1} parent=59 // pred_check
          %p658 = pneg %p183
        $region62: #{tpu_custom_call.1} parent=59 // pred_check_branch
          %660 = sbr.rel (%p658) target = $region64
        $region63: #{tpu_custom_call.1} parent=59 // pred_region
          %s661 = sand.u32 %s168, 1
          %s662 = scalar_lea.sflag [#allocation6], %s661
          %s663 = sand.u32 %s168, 1
          %s664 = smul.addr %s663, 8
          %s665 = scalar_lea.vmem [#allocation7], %s664
          %666 = dma.done %s662, 128
        $region64: #{tpu_custom_call.1} parent=59 // pred_fallthru
          _
      $region60: #{tpu_custom_call.1} parent=5 // pred_fallthru
        _
    $region6: #{tpu_custom_call.1} parent=1 // loop_footer
      %s21 = sadd.s32 1, %s17
    $region7: #{tpu_custom_call.1} parent=1 // loop_footer_branch
      %16 = sbr.rel target = $region3
    $region8: #{tpu_custom_call.1} parent=1 // loop_exit
      _
    %667 = vsyncpa [#allocation5], 1
    %s668 = scalar_lea.sflag [#allocation5], 1
    %669 = vsyncpa %s668, 1
    %670 = vsyncpa [#allocation6], 1
    %s671 = scalar_lea.sflag [#allocation6], 1
    %672 = vsyncpa %s671, 1

</llo_original>
